<compile_context>
chip_gen: v7x
topology: tpu7x:2x2x1
jax: 0.10.0
libtpu: 0.0.40
codegen_flags: <defaults>
</compile_context>

<pallas_src>
import numpy as np
import jax
import jax.numpy as jnp
from jax import lax
from jax.experimental import pallas as pl
from jax.experimental.pallas import tpu as pltpu

# ----- "configer" values (deterministic, in-script) -------------------------
TEMPERATURE = 0.1
BASE_TEMPERATURE = 0.07
MAX_SAMPLES = 1024
MAX_VIEWS = 4
MEMORY_SIZE = 5000
IGNORE_LABEL = -1
LOSS_WEIGHT = 1.0

# Distinct sentinels so a padded anchor row can never be "same class" as a
# padded contrast column (real class ids are >= 0).
_ROW_PAD_LABEL = -1.0e6
_COL_PAD_LABEL = -2.0e6
_NEG_BIG = -1.0e30


def _round_up(x, m):
    return ((x + m - 1) // m) * m


# ----------------------------------------------------------------------------
# Pallas kernel: one row strip of the _contrastive() hot path.
#   a_ref      : (TM, Dp)  bf16  anchor feature strip (MXU LHS)
#   ct_ref     : (Dp, Npc) bf16  pre-transposed contrast features (resident RHS)
#   ycol_ref   : (TM, 1)   f32   per-row class labels of this strip
#   yrow_ref   : (1, Npc)  f32   per-column class labels
#   invcnt_ref : (TM, 1)   f32   exact 1/pos_cnt per row (0 for padded rows)
#   out_ref    : (TM, 1)   f32   per-row loss (padded rows write exactly 0)
# ----------------------------------------------------------------------------
def _make_contrastive_kernel(temperature, base_temperature, tm, tc, n_real):
    # Plain Python scalars only -> no captured jnp constants in the kernel.
    inv_temp = float(1.0 / temperature)
    neg_scale = float(-(temperature / base_temperature))

    def kernel(a_ref, ct_ref, ycol_ref, yrow_ref, invcnt_ref, out_ref):
        npc = ct_ref.shape[1]
        n_tiles = npc // tc
        last = n_tiles - 1
        rem = n_real - last * tc            # valid columns in the last tile (1..tc)

        # (TM, Dp) @ (Dp, Npc) on the MXU: bf16 operands, f32 accumulation.
        # RHS is already in [K, N] layout, so no in-kernel relayout/transpose.
        adc = lax.dot_general(
            a_ref[...], ct_ref[...],
            dimension_numbers=(((1,), (0,)), ((), ())),
            preferred_element_type=jnp.float32,
        ) * inv_temp                                            # only full (TM, Npc) temp

        y_col = ycol_ref[...]                                   # (TM, 1)
        y_row = yrow_ref[...]                                   # (1, Npc)
        inv_cnt = invcnt_ref[...]                               # (TM, 1)
        base = pl.program_id(0) * tm
        row_idx = lax.broadcasted_iota(jnp.int32, (tm, 1), 0) + base

        last_valid = None
        if rem < tc:                        # only the final column tile can be partial
            last_valid = lax.broadcasted_iota(jnp.int32, (1, tc), 1) < rem

        # ---- pass A: row max, streamed over column tiles ---------------------
        m = jnp.full((tm, 1), _NEG_BIG, dtype=jnp.float32)
        for t in range(n_tiles):
            tile = adc[:, t * tc:(t + 1) * tc]
            if t == last and last_valid is not None:
                tile = jnp.where(last_valid, tile, _NEG_BIG)
            m = jnp.maximum(m, jnp.max(tile, axis=1, keepdims=True))

        # ---- pass B: sum of exp(logits) over negative pairs -------------------
        neg = jnp.zeros((tm, 1), dtype=jnp.float32)
        for t in range(n_tiles):
            tile = adc[:, t * tc:(t + 1) * tc]
            same = y_col == y_row[:, t * tc:(t + 1) * tc]
            keep = jnp.logical_not(same)
            if t == last and last_valid is not None:
                keep = jnp.logical_and(keep, last_valid)
            e = jnp.exp(tile - m)
            neg = neg + jnp.sum(jnp.where(keep, e, 0.0), axis=1, keepdims=True)

        # ---- pass C: sum of log-probs over positive pairs ---------------------
        pos_sum = jnp.zeros((tm, 1), dtype=jnp.float32)
        for t in range(n_tiles):
            lo = t * tc
            tile = adc[:, lo:lo + tc]
            same = y_col == y_row[:, lo:lo + tc]
            col_idx = lax.broadcasted_iota(jnp.int32, (1, tc), 1) + lo
            pos = jnp.logical_and(same, row_idx != col_idx)     # same class, not self
            logits = tile - m
            log_prob = logits - jnp.log(jnp.exp(logits) + neg)
            pos_sum = pos_sum + jnp.sum(jnp.where(pos, log_prob, 0.0),
                                        axis=1, keepdims=True)

        # NOTE: a *real* row with zero positive pairs (only possible when
        # n_view == 1) is NaN in the torch reference; here inv_cnt == 0 makes
        # it (and every padded row) contribute exactly 0 instead.
        out_ref[...] = (neg_scale * pos_sum) * inv_cnt

    return kernel


def _contrastive_pallas(anchor_feature, y_rows,
                        temperature=TEMPERATURE, base_temperature=BASE_TEMPERATURE,
                        tm=256, tc=128):
    """anchor_feature: [N, D] f32, y_rows: [N] per-row class label."""
    anchor_feature = jnp.asarray(anchor_feature, jnp.float32)
    y_rows = jnp.asarray(y_rows, jnp.float32)
    N, D = anchor_feature.shape

    tm = min(tm, _round_up(max(N, 128), 128))   # no oversized single strip for tiny N
    Npr = _round_up(max(N, tm), tm)             # anchor rows: padded to the strip size
    Npc = _round_up(max(N, tc), tc)             # contrast cols: padded only to the tile
    Dp = _round_up(max(D, 128), 128)

    feat_bf16 = anchor_feature.astype(jnp.bfloat16)
    lhs = jnp.zeros((Npr, Dp), jnp.bfloat16).at[:N, :D].set(feat_bf16)
    # Contrast operand pre-transposed once -> native [K, N] MXU RHS layout.
    rhs_t = jnp.zeros((Dp, Npc), jnp.bfloat16).at[:D, :N].set(feat_bf16.T)

    y_col = jnp.full((Npr, 1), _ROW_PAD_LABEL, jnp.float32).at[:N, 0].set(y_rows)
    y_row = jnp.full((1, Npc), _COL_PAD_LABEL, jnp.float32).at[0, :N].set(y_rows)

    # Exact per-row positive count = (#rows sharing the label) - 1 (self excluded);
    # labels-only quantity, computed once here instead of per strip in the kernel.
    pos_cnt = jnp.sum((y_rows[:, None] == y_rows[None, :]).astype(jnp.float32),
                      axis=1) - 1.0
    inv_cnt = jnp.where(pos_cnt > 0, 1.0 / jnp.maximum(pos_cnt, 1.0), 0.0)
    inv_cnt_p = jnp.zeros((Npr, 1), jnp.float32).at[:N, 0].set(inv_cnt)

    n_strips = Npr // tm
    kernel = _make_contrastive_kernel(float(temperature), float(base_temperature),
                                      tm, tc, N)

    loss_rows = pl.pallas_call(
        kernel,
        out_shape=jax.ShapeDtypeStruct((Npr, 1), jnp.float32),
        grid=(n_strips,),
        in_specs=[
            pl.BlockSpec((tm, Dp), lambda i: (i, 0)),    # anchor row strip (MXU LHS)
            pl.BlockSpec((Dp, Npc), lambda i: (0, 0)),   # resident transposed RHS
            pl.BlockSpec((tm, 1), lambda i: (i, 0)),     # strip labels
            pl.BlockSpec((1, Npc), lambda i: (0, 0)),    # column labels
            pl.BlockSpec((tm, 1), lambda i: (i, 0)),     # exact 1/pos_cnt
        ],
        out_specs=pl.BlockSpec((tm, 1), lambda i: (i, 0)),
        compiler_params=pltpu.CompilerParams(
            dimension_semantics=("parallel",),           # megacore-splittable strips
            vmem_limit_bytes=32 * 1024 * 1024),
    )(lhs, rhs_t, y_col, y_row, inv_cnt_p)

    # Padded rows wrote exactly 0, so the mean over real rows is a trivial sum.
    return jnp.sum(loss_rows) / jnp.float32(N)


# ----------------------------------------------------------------------------
# Pallas kernel: MSE term of ContrastMSELoss (tiled sum of squared differences).
# Accumulates a (1, 128) lane-wise partial across row blocks; final mean in jnp.
# ----------------------------------------------------------------------------
def _make_mse_kernel(ts, lanes, n, need_mask):
    def kernel(p_ref, t_ref, acc_ref):
        @pl.when(pl.program_id(0) == 0)
        def _():
            acc_ref[...] = jnp.zeros_like(acc_ref)
        d = p_ref[...] - t_ref[...]
        dd = d * d
        if need_mask:                       # only when the last row block is ragged
            row0 = pl.program_id(0) * ts
            gidx = ((lax.broadcasted_iota(jnp.int32, (ts, lanes), 0) + row0) * lanes
                    + lax.broadcasted_iota(jnp.int32, (ts, lanes), 1))
            dd = jnp.where(gidx < n, dd, 0.0)
        acc_ref[...] += jnp.sum(dd, axis=0, keepdims=True)
    return kernel


def mse_loss_pallas(pred, target, max_rows_per_block=512):
    pred = jnp.asarray(pred, jnp.float32).reshape(-1)
    target = jnp.asarray(target, jnp.float32).reshape(-1)
    n = int(pred.shape[0])
    lanes = 128
    if n % lanes != 0:
        # TODO(synk): rare non-multiple-of-128 sizes take one small padded copy.
        padded = _round_up(n, lanes)
        pred = jnp.zeros((padded,), jnp.float32).at[:n].set(pred)
        target = jnp.zeros((padded,), jnp.float32).at[:n].set(target)
    rows = pred.shape[0] // lanes
    p2 = pred.reshape(rows, lanes)          # free reshape: no padded HBM copies
    t2 = target.reshape(rows, lanes)

    if rows <= max_rows_per_block:
        ts = rows                           # single block == full array dims
        grid = 1
        need_mask = False                   # any padding is explicit matching zeros
    else:
        ts = max_rows_per_block             # multiple of 8
        grid = pl.cdiv(rows, ts)
        need_mask = (rows % ts) != 0        # mask garbage in the ragged last block

    lane_sums = pl.pallas_call(
        _make_mse_kernel(ts, lanes, n, need_mask),
        out_shape=jax.ShapeDtypeStruct((1, lanes), jnp.float32),
        grid=(grid,),
        in_specs=[pl.BlockSpec((ts, lanes), lambda i: (i, 0)),
                  pl.BlockSpec((ts, lanes), lambda i: (i, 0))],
        out_specs=pl.BlockSpec((1, lanes), lambda i: (0, 0)),
        compiler_params=pltpu.CompilerParams(
            dimension_semantics=("arbitrary",)),          # output accumulated across blocks
    )(p2, t2)
    return jnp.sum(lane_sums) / jnp.float32(n)


# ----------------------------------------------------------------------------
# Host-side glue (matches the PyTorch module's data-dependent preprocessing)
# ----------------------------------------------------------------------------
def _nearest_interp_np(labels, out_h, out_w):
    """PyTorch F.interpolate(mode='nearest') on an integer [B, H, W] label map."""
    labels = np.asarray(labels)
    B, Hl, Wl = labels.shape
    rows = (np.arange(out_h) * Hl) // out_h
    cols = (np.arange(out_w) * Wl) // out_w
    return labels[:, rows][:, :, cols]


def _hard_anchor_sampling_np(X, y_hat, y, max_samples, max_views,
                             ignore_label=IGNORE_LABEL, seed=0):
    """Deterministic numpy port of PixelContrastLoss._hard_anchor_sampling."""
    # TODO(synk): torch.unique / nonzero / randperm produce data-dependent shapes;
    # no clean static-shape Pallas equivalent, so this stage runs host-side.
    rng = np.random.RandomState(seed)
    batch_size, feat_dim = X.shape[0], X.shape[-1]
    classes, total_classes = [], 0
    for ii in range(batch_size):
        this_y = y_hat[ii]
        cls = [c for c in np.unique(this_y) if c != ignore_label]
        cls = [c for c in cls if (this_y == c).sum() > max_views]
        classes.append(cls)
        total_classes += len(cls)
    if total_classes == 0:
        return None, None
    n_view = max_samples // total_classes
    n_view = min(n_view, max_views)
    X_ = np.zeros((total_classes, n_view, feat_dim), dtype=np.float32)
    y_ = np.zeros((total_classes,), dtype=np.float32)
    ptr = 0
    for ii in range(batch_size):
        this_y_hat, this_y = y_hat[ii], y[ii]
        for cls_id in classes[ii]:
            hard = np.nonzero((this_y_hat == cls_id) & (this_y != cls_id))[0]
            easy = np.nonzero((this_y_hat == cls_id) & (this_y == cls_id))[0]
            num_hard, num_easy = hard.shape[0], easy.shape[0]
            if num_hard >= n_view / 2 and num_easy >= n_view / 2:
                num_hard_keep = n_view // 2
                num_easy_keep = n_view - num_hard_keep
            elif num_hard >= n_view / 2:
                num_easy_keep = num_easy
                num_hard_keep = n_view - num_easy_keep
            elif num_easy >= n_view / 2:
                num_hard_keep = num_hard
                num_easy_keep = n_view - num_hard_keep
            else:
                raise Exception("this should never be touched")
            hard = hard[rng.permutation(num_hard)[:num_hard_keep]]
            easy = easy[rng.permutation(num_easy)[:num_easy_keep]]
            idx = np.concatenate([hard, easy], axis=0)
            X_[ptr] = X[ii, idx, :]
            y_[ptr] = cls_id
            ptr += 1
    return X_, y_


def pixel_contrast_loss(feats, labels, predict, queue=None):
    """Forward pass of PixelContrastLoss.
       feats: [B, C, H, W] f32 (NCHW), labels: [B, Hl, Wl] int, predict: [B, H, W] int."""
    if queue is not None:
        # TODO(synk): memory-bank (queue / _sample_negative) path not implemented.
        raise NotImplementedError("queue path not implemented")
    B, C, H, W = feats.shape
    labels_i = _nearest_interp_np(labels, H, W).reshape(B, -1)     # nearest resize + flatten
    predict_f = np.asarray(predict).reshape(B, -1)
    feats_nhwc = np.asarray(jnp.transpose(feats, (0, 2, 3, 1))).reshape(B, -1, C)

    max_views = min(MAX_VIEWS, MEMORY_SIZE)
    X_, y_ = _hard_anchor_sampling_np(feats_nhwc, labels_i, predict_f, MAX_SAMPLES, max_views)
    if X_ is None:
        return jnp.zeros((), jnp.float32)

    A, n_view, D = X_.shape
    # anchor_feature = cat(unbind(X_, dim=1), dim=0)  -> view-major row ordering
    anchor_feature = np.transpose(X_, (1, 0, 2)).reshape(n_view * A, D)
    y_rows = np.tile(y_, n_view)
    return _contrastive_pallas(jnp.asarray(anchor_feature), jnp.asarray(y_rows))


def contrast_mse_loss(preds, target, with_embed=True):
    """Forward of ContrastMSELoss.  `target` = (target_thick, target_thin).
       Without the memory-bank queues the torch code sets loss_contrast = 0."""
    target_thick, target_thin = target[0], target[1]
    assert 'seg_thick' in preds and 'embed_thick' in preds
    assert 'seg_thin' in preds and 'embed_thin' in preds
    loss = (mse_loss_pallas(preds['seg_thick'], target_thick)
            + mse_loss_pallas(preds['seg_thin'], target_thin))
    has_queues = all(k in preds for k in ('segment_queue_thick', 'pixel_queue_thick',
                                          'segment_queue_thin', 'pixel_queue_thin'))
    if has_queues:
        # TODO(synk): queue branch needs cv2 Otsu thresholding + _sample_negative
        # (data-dependent shapes / OpenCV); not implemented.
        raise NotImplementedError("memory-bank / Otsu queue path not implemented")
    loss_contrast = jnp.zeros((), jnp.float32)
    if with_embed:
        return loss + LOSS_WEIGHT * loss_contrast
    return loss + 0.0 * loss_contrast


# ----------------------------------------------------------------------------
# Pure-numpy reference of _contrastive (follows the torch code line by line)
# ----------------------------------------------------------------------------
def _contrastive_ref_np(X_anchor, y_anchor, temperature=TEMPERATURE, base_temperature=BASE_TEMPERATURE):
    A, n_view, D = X_anchor.shape
    y = y_anchor.reshape(-1, 1)
    anchor_feature = np.transpose(X_anchor, (1, 0, 2)).reshape(n_view * A, D)
    contrast_feature = anchor_feature
    base_mask = (y == y.T).astype(np.float64)
    adc = anchor_feature.astype(np.float64) @ contrast_feature.T.astype(np.float64) / temperature
    logits = adc - adc.max(axis=1, keepdims=True)
    mask = np.tile(base_mask, (n_view, n_view))
    neg_mask = 1.0 - mask
    logits_mask = np.ones_like(mask)
    np.fill_diagonal(logits_mask, 0.0)
    mask = mask * logits_mask
    neg_logits = (np.exp(logits) * neg_mask).sum(1, keepdims=True)
    log_prob = logits - np.log(np.exp(logits) + neg_logits)
    mean_log_prob_pos = (mask * log_prob).sum(1) / mask.sum(1)
    loss = -(temperature / base_temperature) * mean_log_prob_pos
    return loss.mean()


if __name__ == "__main__":
    key = jax.random.PRNGKey(0)
    B, C, H, W = 2, 32, 16, 16
    k1, k2, k3 = jax.random.split(key, 3)

    feats = jax.random.normal(k1, (B, C, H, W), jnp.float32)
    # L2-normalize along the channel dim (as projection-head embeddings would be)
    feats = feats / jnp.linalg.norm(feats, axis=1, keepdims=True)

    # high-res ground-truth label map (exercises the nearest interpolation path)
    labels = jax.random.randint(k2, (B, 2 * H, 2 * W), 0, 3, dtype=jnp.int32)
    labels_small = _nearest_interp_np(labels, H, W)
    # predictions: flip ~30% of pixels to a wrong class (gives hard + easy anchors)
    flip = np.asarray(jax.random.bernoulli(k3, 0.3, (B, H, W)))
    predict = np.where(flip, (labels_small + 1) % 3, labels_small).astype(np.int32)

    # ---- contrastive hot path (Pallas tiled kernel) -------------------------
    loss = pixel_contrast_loss(feats, labels, predict)
    loss = jax.block_until_ready(loss)

    labels_flat = labels_small.reshape(B, -1)
    predict_flat = predict.reshape(B, -1)
    feats_nhwc = np.asarray(jnp.transpose(feats, (0, 2, 3, 1))).reshape(B, -1, C)
    X_, y_ = _hard_anchor_sampling_np(feats_nhwc, labels_flat, predict_flat,
                                      MAX_SAMPLES, min(MAX_VIEWS, MEMORY_SIZE))
    loss_ref = _contrastive_ref_np(X_, y_)
    # Tolerance 2e-2: the MXU runs bf16 operands (f32 accumulation) per the review.
    np.testing.assert_allclose(float(loss), float(loss_ref), rtol=2e-2, atol=2e-2)

    # ---- ContrastMSELoss queue-less path (MSE Pallas kernel) ----------------
    mk = jax.random.split(jax.random.fold_in(key, 123), 4)
    seg_thick = jax.random.uniform(mk[0], (B, 1, H, W), jnp.float32)
    seg_thin = jax.random.uniform(mk[1], (B, 1, H, W), jnp.float32)
    target_thick = jax.random.uniform(mk[2], (B, 1, H, W), jnp.float32)
    target_thin = jax.random.uniform(mk[3], (B, 1, H, W), jnp.float32)
    preds = {'seg_thick': seg_thick, 'embed_thick': feats,
             'seg_thin': seg_thin, 'embed_thin': feats}
    total_loss = contrast_mse_loss(preds, (target_thick, target_thin))
    total_loss = jax.block_until_ready(total_loss)
    mse_ref = (np.mean((np.asarray(seg_thick) - np.asarray(target_thick)) ** 2)
               + np.mean((np.asarray(seg_thin) - np.asarray(target_thin)) ** 2))
    np.testing.assert_allclose(float(total_loss), float(mse_ref), rtol=1e-4, atol=1e-6)

    print("KERNEL_OK")
</pallas_src>

<mosaic_0001>
module attributes {stable_mosaic.version = 11 : i64} {
  func.func @kernel(%arg0: i32, %arg1: memref<128x128xbf16, #tpu.memory_space<vmem>>, %arg2: memref<128x128xbf16, #tpu.memory_space<vmem>>, %arg3: memref<128x1xf32, #tpu.memory_space<vmem>>, %arg4: memref<1x128xf32, #tpu.memory_space<vmem>>, %arg5: memref<128x1xf32, #tpu.memory_space<vmem>>, %arg6: memref<128x1xf32, #tpu.memory_space<vmem>>) attributes {dimension_semantics = [#tpu.dimension_semantics<parallel>], iteration_bounds = array<i64: 1>, scalar_prefetch = 0 : i64, scratch_operands = 0 : i64, tpu.core_type = #tpu.core_type<tc>, window_params = [{transform_indices = @transform_0, window_bounds = array<i64: 128, 128>}, {pipeline_mode = #tpu.pipeline_mode<synchronous>, transform_indices = @transform_1, window_bounds = array<i64: 128, 128>}, {transform_indices = @transform_2, window_bounds = array<i64: 128, 1>}, {pipeline_mode = #tpu.pipeline_mode<synchronous>, transform_indices = @transform_3, window_bounds = array<i64: 1, 128>}, {transform_indices = @transform_4, window_bounds = array<i64: 128, 1>}, {transform_indices = @transform_5, window_bounds = array<i64: 128, 1>}]} {
    %c0 = arith.constant 0 : index
    %c0_0 = arith.constant 0 : index
    %0 = vector.load %arg1[%c0, %c0_0] : memref<128x128xbf16, #tpu.memory_space<vmem>>, vector<128x128xbf16>
    %c0_1 = arith.constant 0 : index
    %c0_2 = arith.constant 0 : index
    %1 = vector.load %arg2[%c0_1, %c0_2] : memref<128x128xbf16, #tpu.memory_space<vmem>>, vector<128x128xbf16>
    %cst = arith.constant dense<0.000000e+00> : vector<128x128xf32>
    %2 = tpu.matmul %0, %1, %cst {dimension_numbers = #tpu.dot_dimension_numbers<[1], [0], [0], [1], [0, 0, 1, 1], [], []>} : vector<128x128xbf16>, vector<128x128xbf16>, vector<128x128xf32> -> vector<128x128xf32>
    %cst_3 = arith.constant 1.000000e+01 : f32
    %3 = vector.broadcast %cst_3 : f32 to vector<128x128xf32>
    %4 = arith.mulf %2, %3 : vector<128x128xf32>
    %c0_4 = arith.constant 0 : index
    %c0_5 = arith.constant 0 : index
    %5 = vector.load %arg3[%c0_4, %c0_5] : memref<128x1xf32, #tpu.memory_space<vmem>>, vector<128x1xf32>
    %c0_6 = arith.constant 0 : index
    %c0_7 = arith.constant 0 : index
    %6 = vector.load %arg4[%c0_6, %c0_7] : memref<1x128xf32, #tpu.memory_space<vmem>>, vector<1x128xf32>
    %c0_8 = arith.constant 0 : index
    %c0_9 = arith.constant 0 : index
    %7 = vector.load %arg5[%c0_8, %c0_9] : memref<128x1xf32, #tpu.memory_space<vmem>>, vector<128x1xf32>
    %c128_i32 = arith.constant 128 : i32
    %8 = arith.muli %arg0, %c128_i32 : i32
    %9 = tpu.iota {dimensions = array<i32: 0>} : vector<128x1xi32>
    %10 = vector.broadcast %8 : i32 to vector<128x1xi32>
    %11 = arith.addi %9, %10 : vector<128x1xi32>
    %12 = tpu.iota {dimensions = array<i32: 1>} : vector<1x128xi32>
    %c24_i32 = arith.constant 24 : i32
    %13 = vector.broadcast %c24_i32 : i32 to vector<1x128xi32>
    %14 = arith.cmpi slt, %12, %13 : vector<1x128xi32>
    %cst_10 = arith.constant -1.000000e+30 : f32
    %15 = vector.broadcast %cst_10 : f32 to vector<128x1xf32>
    %cst_11 = arith.constant -1.000000e+30 : f32
    %16 = vector.shape_cast %14 : vector<1x128xi1> to vector<1x128xi1>
    %17 = vector.broadcast %16 : vector<1x128xi1> to vector<128x128xi1>
    %18 = vector.broadcast %cst_11 : f32 to vector<128x128xf32>
    %19 = arith.select %17, %4, %18 : vector<128x128xi1>, vector<128x128xf32>
    %cst_12 = arith.constant dense<0xFF800000> : vector<128xf32>
    %20 = vector.multi_reduction <maximumf>, %19, %cst_12 [1] : vector<128x128xf32> to vector<128xf32>
    %21 = vector.shape_cast %20 : vector<128xf32> to vector<128x1xf32>
    %22 = arith.maximumf %15, %21 : vector<128x1xf32>
    %cst_13 = arith.constant 0.000000e+00 : f32
    %23 = vector.broadcast %cst_13 : f32 to vector<128x1xf32>
    %24 = vector.broadcast %5 : vector<128x1xf32> to vector<128x128xf32>
    %25 = vector.broadcast %6 : vector<1x128xf32> to vector<128x128xf32>
    %26 = arith.cmpf oeq, %24, %25 : vector<128x128xf32>
    %cst_14 = arith.constant dense<true> : vector<128x128xi1>
    %27 = arith.xori %26, %cst_14 : vector<128x128xi1>
    %28 = vector.broadcast %14 : vector<1x128xi1> to vector<128x128xi1>
    %29 = arith.andi %27, %28 : vector<128x128xi1>
    %30 = vector.broadcast %22 : vector<128x1xf32> to vector<128x128xf32>
    %31 = arith.subf %4, %30 : vector<128x128xf32>
    %32 = math.exp %31 : vector<128x128xf32>
    %cst_15 = arith.constant 0.000000e+00 : f32
    %33 = vector.broadcast %cst_15 : f32 to vector<128x128xf32>
    %34 = arith.select %29, %32, %33 : vector<128x128xi1>, vector<128x128xf32>
    %cst_16 = arith.constant dense<0.000000e+00> : vector<128xf32>
    %35 = vector.multi_reduction <add>, %34, %cst_16 [1] : vector<128x128xf32> to vector<128xf32>
    %36 = vector.shape_cast %35 : vector<128xf32> to vector<128x1xf32>
    %37 = arith.addf %23, %36 : vector<128x1xf32>
    %cst_17 = arith.constant 0.000000e+00 : f32
    %38 = vector.broadcast %cst_17 : f32 to vector<128x1xf32>
    %39 = vector.broadcast %5 : vector<128x1xf32> to vector<128x128xf32>
    %40 = vector.broadcast %6 : vector<1x128xf32> to vector<128x128xf32>
    %41 = arith.cmpf oeq, %39, %40 : vector<128x128xf32>
    %42 = tpu.iota {dimensions = array<i32: 1>} : vector<1x128xi32>
    %c0_i32 = arith.constant 0 : i32
    %43 = vector.broadcast %c0_i32 : i32 to vector<1x128xi32>
    %44 = arith.addi %42, %43 : vector<1x128xi32>
    %45 = vector.broadcast %11 : vector<128x1xi32> to vector<128x128xi32>
    %46 = vector.broadcast %44 : vector<1x128xi32> to vector<128x128xi32>
    %47 = arith.cmpi ne, %45, %46 : vector<128x128xi32>
    %48 = arith.andi %41, %47 : vector<128x128xi1>
    %49 = vector.broadcast %22 : vector<128x1xf32> to vector<128x128xf32>
    %50 = arith.subf %4, %49 : vector<128x128xf32>
    %51 = math.exp %50 : vector<128x128xf32>
    %52 = vector.broadcast %37 : vector<128x1xf32> to vector<128x128xf32>
    %53 = arith.addf %51, %52 : vector<128x128xf32>
    %54 = math.log %53 : vector<128x128xf32>
    %55 = arith.subf %50, %54 : vector<128x128xf32>
    %cst_18 = arith.constant 0.000000e+00 : f32
    %56 = vector.broadcast %cst_18 : f32 to vector<128x128xf32>
    %57 = arith.select %48, %55, %56 : vector<128x128xi1>, vector<128x128xf32>
    %cst_19 = arith.constant dense<0.000000e+00> : vector<128xf32>
    %58 = vector.multi_reduction <add>, %57, %cst_19 [1] : vector<128x128xf32> to vector<128xf32>
    %59 = vector.shape_cast %58 : vector<128xf32> to vector<128x1xf32>
    %60 = arith.addf %38, %59 : vector<128x1xf32>
    %cst_20 = arith.constant -1.42857146 : f32
    %61 = vector.broadcast %cst_20 : f32 to vector<128x1xf32>
    %62 = arith.mulf %61, %60 : vector<128x1xf32>
    %63 = arith.mulf %62, %7 : vector<128x1xf32>
    %c0_21 = arith.constant 0 : index
    %c0_22 = arith.constant 0 : index
    %64 = vector.load %arg6[%c0_21, %c0_22] : memref<128x1xf32, #tpu.memory_space<vmem>>, vector<128x1xf32>
    tpu.vector_store %arg6[%c0_21, %c0_22], %63 {strides = array<i32>} : memref<128x1xf32, #tpu.memory_space<vmem>>, vector<128x1xf32>,
    return
  }
  func.func @transform_0(%arg0: i32) -> (i32, i32) {
    %c0_i32 = arith.constant 0 : i32
    %c0_i32_0 = arith.constant 0 : i32
    return %arg0, %c0_i32 : i32, i32
  }
  func.func @transform_1(%arg0: i32) -> (i32, i32) {
    %c0_i32 = arith.constant 0 : i32
    %c0_i32_0 = arith.constant 0 : i32
    %c0_i32_1 = arith.constant 0 : i32
    return %c0_i32, %c0_i32_0 : i32, i32
  }
  func.func @transform_2(%arg0: i32) -> (i32, i32) {
    %c0_i32 = arith.constant 0 : i32
    %c0_i32_0 = arith.constant 0 : i32
    return %arg0, %c0_i32 : i32, i32
  }
  func.func @transform_3(%arg0: i32) -> (i32, i32) {
    %c0_i32 = arith.constant 0 : i32
    %c0_i32_0 = arith.constant 0 : i32
    %c0_i32_1 = arith.constant 0 : i32
    return %c0_i32, %c0_i32_0 : i32, i32
  }
  func.func @transform_4(%arg0: i32) -> (i32, i32) {
    %c0_i32 = arith.constant 0 : i32
    %c0_i32_0 = arith.constant 0 : i32
    return %arg0, %c0_i32 : i32, i32
  }
  func.func @transform_5(%arg0: i32) -> (i32, i32) {
    %c0_i32 = arith.constant 0 : i32
    %c0_i32_0 = arith.constant 0 : i32
    return %arg0, %c0_i32 : i32, i32
  }
}

</mosaic_0001>

<llo_original>
// kernel: tpu_custom_call.1
$region0: #{tpu_custom_call.1}
  #allocation0 [shape = 'u32[]', space=smem, size = 0x4, offset = 0x4, fixed_abs, tag = 'smem constant byte address 0x4 - core index']
  #allocation1 [shape = 'u32[144,128]{1,0:T(1,128)}', space=vmem, size = 0x12000, scoped, tag = 'internal scratch']
  %s0 = inlined_call_operand.vmem [shape: bf16[128,128], index: 0, kind: input, shape index: {}]
  %s1 = inlined_call_operand.vmem [shape: bf16[128,128], index: 1, kind: input, shape index: {}]
  %s2 = inlined_call_operand.vmem [shape: f32[128,1], index: 2, kind: input, shape index: {}]
  %s3 = inlined_call_operand.vmem [shape: f32[1,128], index: 3, kind: input, shape index: {}]
  %s4 = inlined_call_operand.vmem [shape: f32[128,1], index: 4, kind: input, shape index: {}]
  %s5 = inlined_call_operand.vmem [shape: f32[128,1], index: 5, kind: output, shape index: {}]
  %s6 = sld [smem:[#allocation0]]
  $region30: #{tpu_custom_call.1} parent=0
    _
  %s8 = ssub.s32 1, %s6
  %s9 = scalar_select 0, %s8, %s6
  // Predicated region
  $region2: #{tpu_custom_call.1} parent=0 // pred_check
    _
  $region3: #{tpu_custom_call.1} parent=0 // pred_check_branch
    %11 = sbr.rel (0) target = $region5
  $region4: #{tpu_custom_call.1} parent=0 // pred_region
    _
  $region5: #{tpu_custom_call.1} parent=0 // pred_fallthru
    _
  // Predicated region
  $region6: #{tpu_custom_call.1} parent=0 // pred_check
    _
  $region7: #{tpu_custom_call.1} parent=0 // pred_check_branch
    %13 = sbr.rel (0) target = $region9
  $region8: #{tpu_custom_call.1} parent=0 // pred_region
    _
  $region9: #{tpu_custom_call.1} parent=0 // pred_fallthru
    _
  // Predicated region
  $region10: #{tpu_custom_call.1} parent=0 // pred_check
    _
  $region11: #{tpu_custom_call.1} parent=0 // pred_check_branch
    %15 = sbr.rel (0) target = $region13
  $region12: #{tpu_custom_call.1} parent=0 // pred_region
    _
  $region13: #{tpu_custom_call.1} parent=0 // pred_fallthru
    _
  // Predicated region
  $region14: #{tpu_custom_call.1} parent=0 // pred_check
    _
  $region15: #{tpu_custom_call.1} parent=0 // pred_check_branch
    %17 = sbr.rel (0) target = $region17
  $region16: #{tpu_custom_call.1} parent=0 // pred_region
    _
  $region17: #{tpu_custom_call.1} parent=0 // pred_fallthru
    _
  // Predicated region
  $region18: #{tpu_custom_call.1} parent=0 // pred_check
    _
  $region19: #{tpu_custom_call.1} parent=0 // pred_check_branch
    %19 = sbr.rel (0) target = $region21
  $region20: #{tpu_custom_call.1} parent=0 // pred_region
    _
  $region21: #{tpu_custom_call.1} parent=0 // pred_fallthru
    _
  %v21 = vld [vmem:[%s0] sm:$0xf]
  %v22 = vld [vmem:[%s0 + $0x4] sm:$0xf]
  %v23 = vld [vmem:[%s0 + $0x8] sm:$0xf]
  %v24 = vld [vmem:[%s0 + $0xc] sm:$0xf]
  %v25 = vld [vmem:[%s0 + $0x10] sm:$0xf]
  %v26 = vld [vmem:[%s0 + $0x14] sm:$0xf]
  %v27 = vld [vmem:[%s0 + $0x18] sm:$0xf]
  %v28 = vld [vmem:[%s0 + $0x1c] sm:$0xf]
  %v29 = vld [vmem:[%s0 + $0x20] sm:$0xf]
  %v30 = vld [vmem:[%s0 + $0x24] sm:$0xf]
  %v31 = vld [vmem:[%s0 + $0x28] sm:$0xf]
  %v32 = vld [vmem:[%s0 + $0x2c] sm:$0xf]
  %v33 = vld [vmem:[%s0 + $0x30] sm:$0xf]
  %v34 = vld [vmem:[%s0 + $0x34] sm:$0xf]
  %v35 = vld [vmem:[%s0 + $0x38] sm:$0xf]
  %v36 = vld [vmem:[%s0 + $0x3c] sm:$0xf]
  %v37 = vld [vmem:[%s1] sm:$0xf]
  %v38 = vld [vmem:[%s1 + $0x4] sm:$0xf]
  %v39 = vld [vmem:[%s1 + $0x8] sm:$0xf]
  %v40 = vld [vmem:[%s1 + $0xc] sm:$0xf]
  %v41 = vld [vmem:[%s1 + $0x10] sm:$0xf]
  %v42 = vld [vmem:[%s1 + $0x14] sm:$0xf]
  %v43 = vld [vmem:[%s1 + $0x18] sm:$0xf]
  %v44 = vld [vmem:[%s1 + $0x1c] sm:$0xf]
  %v45 = vld [vmem:[%s1 + $0x20] sm:$0xf]
  %v46 = vld [vmem:[%s1 + $0x24] sm:$0xf]
  %v47 = vld [vmem:[%s1 + $0x28] sm:$0xf]
  %v48 = vld [vmem:[%s1 + $0x2c] sm:$0xf]
  %v49 = vld [vmem:[%s1 + $0x30] sm:$0xf]
  %v50 = vld [vmem:[%s1 + $0x34] sm:$0xf]
  %v51 = vld [vmem:[%s1 + $0x38] sm:$0xf]
  %v52 = vld [vmem:[%s1 + $0x3c] sm:$0xf]
  %v69 = vunpack.c.l.b16 %v21
  %v70 = vunpack.c.l.b16 %v22
  %v71 = vunpack.c.l.b16 %v23
  %v72 = vunpack.c.l.b16 %v24
  %v73 = vunpack.c.l.b16 %v25
  %v74 = vunpack.c.l.b16 %v26
  %v75 = vunpack.c.l.b16 %v27
  %v76 = vunpack.c.l.b16 %v28
  %v77 = vunpack.c.l.b16 %v29
  %v78 = vunpack.c.l.b16 %v30
  %v79 = vunpack.c.l.b16 %v31
  %v80 = vunpack.c.l.b16 %v32
  %v81 = vunpack.c.l.b16 %v33
  %v82 = vunpack.c.l.b16 %v34
  %v83 = vunpack.c.l.b16 %v35
  %v84 = vunpack.c.l.b16 %v36
  %v85 = vpack.c.b16 %v70, %v69
  %v86 = vpack.c.b16 %v72, %v71
  %v87 = vpack.c.b16 %v74, %v73
  %v88 = vpack.c.b16 %v76, %v75
  %v89 = vpack.c.b16 %v78, %v77
  %v90 = vpack.c.b16 %v80, %v79
  %v91 = vpack.c.b16 %v82, %v81
  %v92 = vpack.c.b16 %v84, %v83
  %v117 = vunpack.c.l.b16 %v37
  %v118 = vunpack.c.l.b16 %v38
  %v119 = vunpack.c.l.b16 %v39
  %v120 = vunpack.c.l.b16 %v40
  %v121 = vunpack.c.l.b16 %v41
  %v122 = vunpack.c.l.b16 %v42
  %v123 = vunpack.c.l.b16 %v43
  %v124 = vunpack.c.l.b16 %v44
  %v125 = vunpack.c.l.b16 %v45
  %v126 = vunpack.c.l.b16 %v46
  %v127 = vunpack.c.l.b16 %v47
  %v128 = vunpack.c.l.b16 %v48
  %v129 = vunpack.c.l.b16 %v49
  %v130 = vunpack.c.l.b16 %v50
  %v131 = vunpack.c.l.b16 %v51
  %v132 = vunpack.c.l.b16 %v52
  %v133 = vpack.c.b16 %v118, %v117
  %v134 = vpack.c.b16 %v120, %v119
  %v135 = vpack.c.b16 %v122, %v121
  %v136 = vpack.c.b16 %v124, %v123
  %v137 = vpack.c.b16 %v126, %v125
  %v138 = vpack.c.b16 %v128, %v127
  %v139 = vpack.c.b16 %v130, %v129
  %v140 = vpack.c.b16 %v132, %v131
  %149 = vmatprep.subr.bf16.mxu0 0
  %150 = vmatpush1.bf16.msra.mxu0 %v133
  %151 = vmatprep.subr.bf16.mxu0 0
  %152 = vmatpush1.bf16.msra.mxu0 %v134
  %153 = vmatprep.subr.bf16.mxu0 0
  %154 = vmatpush1.bf16.msra.mxu0 %v135
  %155 = vmatprep.subr.bf16.mxu0 0
  %156 = vmatpush1.bf16.msra.mxu0 %v136
  %157 = vmatprep.subr.bf16.mxu0 0
  %158 = vmatpush1.bf16.msra.mxu0 %v137
  %159 = vmatprep.subr.bf16.mxu0 0
  %160 = vmatpush1.bf16.msra.mxu0 %v138
  %161 = vmatprep.subr.bf16.mxu0 0
  %162 = vmatpush1.bf16.msra.mxu0 %v139
  %163 = vmatprep.subr.bf16.mxu0 0
  %164 = vmatpush1.bf16.msra.mxu0 %v140
  %165 = vmatprep.subr.bf16.mxu0 0
  %166 = vmatpush1.bf16.msra.mxu0 0
  %167 = vmatprep.subr.bf16.mxu0 0
  %168 = vmatpush1.bf16.msra.mxu0 0
  %169 = vmatprep.subr.bf16.mxu0 0
  %170 = vmatpush1.bf16.msra.mxu0 0
  %171 = vmatprep.subr.bf16.mxu0 0
  %172 = vmatpush1.bf16.msra.mxu0 0
  %173 = vmatprep.subr.bf16.mxu0 0
  %174 = vmatpush1.bf16.msra.mxu0 0
  %175 = vmatprep.subr.bf16.mxu0 0
  %176 = vmatpush1.bf16.msra.mxu0 0
  %177 = vmatprep.subr.bf16.mxu0 0
  %178 = vmatpush1.bf16.msra.mxu0 0
  %179 = vmatprep.subr.bf16.mxu0 0
  %180 = vmatpush1.bf16.msra.mxu0 0
  %181 = vmatprep.mubr.bf16.mxu0 0
  %182 = vmatmul.mubr.bf16.gmra.mrb[0].mxu0 %v85
  %v183 = vpop.f32.mrb[0].mxu0
  %v184 = vadd.f32 0.0, %v183
  %v185 = vpop.f32.mrb[0].mxu0
  %v186 = vpop.f32.mrb[0].mxu0
  %v187 = vadd.f32 0.0, %v186
  %v188 = vpop.f32.mrb[0].mxu0
  %189 = vmatprep.mubr.bf16.mxu0 0
  %190 = vmatmul.mubr.bf16.gmra.mrb[0].mxu0 %v86
  %v191 = vpop.f32.mrb[0].mxu0
  %v192 = vadd.f32 0.0, %v191
  %v193 = vpop.f32.mrb[0].mxu0
  %v194 = vpop.f32.mrb[0].mxu0
  %v195 = vadd.f32 0.0, %v194
  %v196 = vpop.f32.mrb[0].mxu0
  %197 = vmatprep.mubr.bf16.mxu0 0
  %198 = vmatmul.mubr.bf16.gmra.mrb[0].mxu0 %v87
  %v199 = vpop.f32.mrb[0].mxu0
  %v200 = vadd.f32 0.0, %v199
  %v201 = vpop.f32.mrb[0].mxu0
  %v202 = vpop.f32.mrb[0].mxu0
  %v203 = vadd.f32 0.0, %v202
  %v204 = vpop.f32.mrb[0].mxu0
  %205 = vmatprep.mubr.bf16.mxu0 0
  %206 = vmatmul.mubr.bf16.gmra.mrb[0].mxu0 %v88
  %v207 = vpop.f32.mrb[0].mxu0
  %v208 = vadd.f32 0.0, %v207
  %v209 = vpop.f32.mrb[0].mxu0
  %v210 = vpop.f32.mrb[0].mxu0
  %v211 = vadd.f32 0.0, %v210
  %v212 = vpop.f32.mrb[0].mxu0
  %213 = vmatprep.mubr.bf16.mxu0 0
  %214 = vmatmul.mubr.bf16.gmra.mrb[0].mxu0 %v89
  %v215 = vpop.f32.mrb[0].mxu0
  %v216 = vadd.f32 0.0, %v215
  %v217 = vpop.f32.mrb[0].mxu0
  %v218 = vpop.f32.mrb[0].mxu0
  %v219 = vadd.f32 0.0, %v218
  %v220 = vpop.f32.mrb[0].mxu0
  %221 = vmatprep.mubr.bf16.mxu0 0
  %222 = vmatmul.mubr.bf16.gmra.mrb[0].mxu0 %v90
  %v223 = vpop.f32.mrb[0].mxu0
  %v224 = vadd.f32 0.0, %v223
  %v225 = vpop.f32.mrb[0].mxu0
  %v226 = vpop.f32.mrb[0].mxu0
  %v227 = vadd.f32 0.0, %v226
  %v228 = vpop.f32.mrb[0].mxu0
  %229 = vmatprep.mubr.bf16.mxu0 0
  %230 = vmatmul.mubr.bf16.gmra.mrb[0].mxu0 %v91
  %v231 = vpop.f32.mrb[0].mxu0
  %v232 = vadd.f32 0.0, %v231
  %v233 = vpop.f32.mrb[0].mxu0
  %v234 = vpop.f32.mrb[0].mxu0
  %v235 = vadd.f32 0.0, %v234
  %v236 = vpop.f32.mrb[0].mxu0
  %237 = vmatprep.mubr.bf16.mxu0 0
  %238 = vmatmul.mubr.bf16.gmra.mrb[0].mxu0 %v92
  %v239 = vpop.f32.mrb[0].mxu0
  %v240 = vadd.f32 0.0, %v239
  %v241 = vpop.f32.mrb[0].mxu0
  %v242 = vpop.f32.mrb[0].mxu0
  %v243 = vadd.f32 0.0, %v242
  %v244 = vpop.f32.mrb[0].mxu0
  %245 = vdwg.mxu0
  %v246 = vmul.f32 %v184, 10.0
  %v247 = vmul.f32 %v187, 10.0
  %v248 = vmul.f32 %v192, 10.0
  %v249 = vmul.f32 %v195, 10.0
  %v250 = vmul.f32 %v200, 10.0
  %v251 = vmul.f32 %v203, 10.0
  %v252 = vmul.f32 %v208, 10.0
  %v253 = vmul.f32 %v211, 10.0
  %v254 = vmul.f32 %v216, 10.0
  %v255 = vmul.f32 %v219, 10.0
  %v256 = vmul.f32 %v224, 10.0
  %v257 = vmul.f32 %v227, 10.0
  %v258 = vmul.f32 %v232, 10.0
  %v259 = vmul.f32 %v235, 10.0
  %v260 = vmul.f32 %v240, 10.0
  %v261 = vmul.f32 %v243, 10.0
  %v262 = vld [vmem:[%s2] sm:$0xff]
  %v263 = vld [vmem:[%s2 + $0x8] sm:$0xff]
  %v264 = vld [vmem:[%s2 + $0x10] sm:$0xff]
  %v265 = vld [vmem:[%s2 + $0x18] sm:$0xff]
  %v266 = vld [vmem:[%s2 + $0x20] sm:$0xff]
  %v267 = vld [vmem:[%s2 + $0x28] sm:$0xff]
  %v268 = vld [vmem:[%s2 + $0x30] sm:$0xff]
  %v269 = vld [vmem:[%s2 + $0x38] sm:$0xff]
  %v270 = vld [vmem:[%s2 + $0x40] sm:$0xff]
  %v271 = vld [vmem:[%s2 + $0x48] sm:$0xff]
  %v272 = vld [vmem:[%s2 + $0x50] sm:$0xff]
  %v273 = vld [vmem:[%s2 + $0x58] sm:$0xff]
  %v274 = vld [vmem:[%s2 + $0x60] sm:$0xff]
  %v275 = vld [vmem:[%s2 + $0x68] sm:$0xff]
  %v276 = vld [vmem:[%s2 + $0x70] sm:$0xff]
  %v277 = vld [vmem:[%s2 + $0x78] sm:$0xff]
  %v278 = vld [vmem:[%s3] sm:$0x1]
  %v279 = vld [vmem:[%s4] sm:$0xff]
  %v280 = vld [vmem:[%s4 + $0x8] sm:$0xff]
  %v281 = vld [vmem:[%s4 + $0x10] sm:$0xff]
  %v282 = vld [vmem:[%s4 + $0x18] sm:$0xff]
  %v283 = vld [vmem:[%s4 + $0x20] sm:$0xff]
  %v284 = vld [vmem:[%s4 + $0x28] sm:$0xff]
  %v285 = vld [vmem:[%s4 + $0x30] sm:$0xff]
  %v286 = vld [vmem:[%s4 + $0x38] sm:$0xff]
  %v287 = vld [vmem:[%s4 + $0x40] sm:$0xff]
  %v288 = vld [vmem:[%s4 + $0x48] sm:$0xff]
  %v289 = vld [vmem:[%s4 + $0x50] sm:$0xff]
  %v290 = vld [vmem:[%s4 + $0x58] sm:$0xff]
  %v291 = vld [vmem:[%s4 + $0x60] sm:$0xff]
  %v292 = vld [vmem:[%s4 + $0x68] sm:$0xff]
  %v293 = vld [vmem:[%s4 + $0x70] sm:$0xff]
  %v294 = vld [vmem:[%s4 + $0x78] sm:$0xff]
  %s295 = smul.u32 0, 128
  %v296 = vlaneseq
  %v297 = vshrl.u32 %v296, 7
  %v298 = vadd.s32 %v297, 8
  %v299 = vadd.s32 %v297, 16
  %v300 = vadd.s32 %v297, 24
  %v301 = vadd.s32 %v297, 32
  %v302 = vadd.s32 %v297, 40
  %v303 = vadd.s32 %v297, 48
  %v304 = vadd.s32 %v297, 56
  %v305 = vadd.s32 %v297, 64
  %v306 = vadd.s32 %v297, 72
  %v307 = vadd.s32 %v297, 80
  %v308 = vadd.s32 %v297, 88
  %v309 = vadd.s32 %v297, 96
  %v310 = vadd.s32 %v297, 104
  %v311 = vadd.s32 %v297, 112
  %v312 = vadd.s32 %v297, 120
  %v313 = vstv %s295
  %v314 = vadd.s32 %v297, %v313
  %v315 = vadd.s32 %v298, %v313
  %v316 = vadd.s32 %v299, %v313
  %v317 = vadd.s32 %v300, %v313
  %v318 = vadd.s32 %v301, %v313
  %v319 = vadd.s32 %v302, %v313
  %v320 = vadd.s32 %v303, %v313
  %v321 = vadd.s32 %v304, %v313
  %v322 = vadd.s32 %v305, %v313
  %v323 = vadd.s32 %v306, %v313
  %v324 = vadd.s32 %v307, %v313
  %v325 = vadd.s32 %v308, %v313
  %v326 = vadd.s32 %v309, %v313
  %v327 = vadd.s32 %v310, %v313
  %v328 = vadd.s32 %v311, %v313
  %v329 = vadd.s32 %v312, %v313
  %v330 = vlaneseq
  %v331 = vand.u32 %v330, 127
  %vm332 = vcmp.lt.s32.totalorder %v331, 24
  %v333 = vsel %vm332, 1, 0
  %vm334 = vcmp.eq.s32.totalorder %v333, 1
  %v335 = vsel %vm334, %v246, -1e+30
  %v336 = vsel %vm334, %v247, -1e+30
  %v337 = vsel %vm334, %v248, -1e+30
  %v338 = vsel %vm334, %v249, -1e+30
  %v339 = vsel %vm334, %v250, -1e+30
  %v340 = vsel %vm334, %v251, -1e+30
  %v341 = vsel %vm334, %v252, -1e+30
  %v342 = vsel %vm334, %v253, -1e+30
  %v343 = vsel %vm334, %v254, -1e+30
  %v344 = vsel %vm334, %v255, -1e+30
  %v345 = vsel %vm334, %v256, -1e+30
  %v346 = vsel %vm334, %v257, -1e+30
  %v347 = vsel %vm334, %v258, -1e+30
  %v348 = vsel %vm334, %v259, -1e+30
  %v349 = vsel %vm334, %v260, -1e+30
  %v350 = vsel %vm334, %v261, -1e+30
  %351 = vmax.xlane.f32.xlu0 %v335
  %v352 = vpop.xlane.xlu0 %351
  %353 = vmax.xlane.f32.xlu0 %v336
  %v354 = vpop.xlane.xlu0 %353
  %355 = vmax.xlane.f32.xlu0 %v337
  %v356 = vpop.xlane.xlu0 %355
  %357 = vmax.xlane.f32.xlu0 %v338
  %v358 = vpop.xlane.xlu0 %357
  %359 = vmax.xlane.f32.xlu0 %v339
  %v360 = vpop.xlane.xlu0 %359
  %361 = vmax.xlane.f32.xlu0 %v340
  %v362 = vpop.xlane.xlu0 %361
  %363 = vmax.xlane.f32.xlu0 %v341
  %v364 = vpop.xlane.xlu0 %363
  %365 = vmax.xlane.f32.xlu0 %v342
  %v366 = vpop.xlane.xlu0 %365
  %367 = vmax.xlane.f32.xlu0 %v343
  %v368 = vpop.xlane.xlu0 %367
  %369 = vmax.xlane.f32.xlu0 %v344
  %v370 = vpop.xlane.xlu0 %369
  %371 = vmax.xlane.f32.xlu0 %v345
  %v372 = vpop.xlane.xlu0 %371
  %373 = vmax.xlane.f32.xlu0 %v346
  %v374 = vpop.xlane.xlu0 %373
  %375 = vmax.xlane.f32.xlu0 %v347
  %v376 = vpop.xlane.xlu0 %375
  %377 = vmax.xlane.f32.xlu0 %v348
  %v378 = vpop.xlane.xlu0 %377
  %379 = vmax.xlane.f32.xlu0 %v349
  %v380 = vpop.xlane.xlu0 %379
  %381 = vmax.xlane.f32.xlu0 %v350
  %v382 = vpop.xlane.xlu0 %381
  %v383 = vmax.f32 %v352, -1e+30
  %v384 = vmax.f32 %v354, -1e+30
  %v385 = vmax.f32 %v356, -1e+30
  %v386 = vmax.f32 %v358, -1e+30
  %v387 = vmax.f32 %v360, -1e+30
  %v388 = vmax.f32 %v362, -1e+30
  %v389 = vmax.f32 %v364, -1e+30
  %v390 = vmax.f32 %v366, -1e+30
  %v391 = vmax.f32 %v368, -1e+30
  %v392 = vmax.f32 %v370, -1e+30
  %v393 = vmax.f32 %v372, -1e+30
  %v394 = vmax.f32 %v374, -1e+30
  %v395 = vmax.f32 %v376, -1e+30
  %v396 = vmax.f32 %v378, -1e+30
  %v397 = vmax.f32 %v380, -1e+30
  %v398 = vmax.f32 %v382, -1e+30
  %400 = vset.pattern.permute.xlu0 0
  %401 = vperm.xlu0 %400, %v262
  %v402 = vpop.permute.xlu0 %401
  %405 = vset.pattern.permute.xlu0 0
  %406 = vperm.xlu0 %405, %v263
  %v407 = vpop.permute.xlu0 %406
  %410 = vset.pattern.permute.xlu0 0
  %411 = vperm.xlu0 %410, %v264
  %v412 = vpop.permute.xlu0 %411
  %415 = vset.pattern.permute.xlu0 0
  %416 = vperm.xlu0 %415, %v265
  %v417 = vpop.permute.xlu0 %416
  %420 = vset.pattern.permute.xlu0 0
  %421 = vperm.xlu0 %420, %v266
  %v422 = vpop.permute.xlu0 %421
  %425 = vset.pattern.permute.xlu0 0
  %426 = vperm.xlu0 %425, %v267
  %v427 = vpop.permute.xlu0 %426
  %430 = vset.pattern.permute.xlu0 0
  %431 = vperm.xlu0 %430, %v268
  %v432 = vpop.permute.xlu0 %431
  %435 = vset.pattern.permute.xlu0 0
  %436 = vperm.xlu0 %435, %v269
  %v437 = vpop.permute.xlu0 %436
  %440 = vset.pattern.permute.xlu0 0
  %441 = vperm.xlu0 %440, %v270
  %v442 = vpop.permute.xlu0 %441
  %445 = vset.pattern.permute.xlu0 0
  %446 = vperm.xlu0 %445, %v271
  %v447 = vpop.permute.xlu0 %446
  %450 = vset.pattern.permute.xlu0 0
  %451 = vperm.xlu0 %450, %v272
  %v452 = vpop.permute.xlu0 %451
  %455 = vset.pattern.permute.xlu0 0
  %456 = vperm.xlu0 %455, %v273
  %v457 = vpop.permute.xlu0 %456
  %460 = vset.pattern.permute.xlu0 0
  %461 = vperm.xlu0 %460, %v274
  %v462 = vpop.permute.xlu0 %461
  %465 = vset.pattern.permute.xlu0 0
  %466 = vperm.xlu0 %465, %v275
  %v467 = vpop.permute.xlu0 %466
  %470 = vset.pattern.permute.xlu0 0
  %471 = vperm.xlu0 %470, %v276
  %v472 = vpop.permute.xlu0 %471
  %475 = vset.pattern.permute.xlu0 0
  %476 = vperm.xlu0 %475, %v277
  %v477 = vpop.permute.xlu0 %476
  %v480 = vlaneseq
  %v481 = vshrl.u32 %v480, 7
  %v482 = vsub.s32 0, %v481
  %v483 = vrot.slane %v278, %v482
  %vm485 = vcmp.eq.f32.partialorder %v402, %v483
  %vm486 = vcmp.eq.f32.partialorder %v407, %v483
  %vm487 = vcmp.eq.f32.partialorder %v412, %v483
  %vm488 = vcmp.eq.f32.partialorder %v417, %v483
  %vm489 = vcmp.eq.f32.partialorder %v422, %v483
  %vm490 = vcmp.eq.f32.partialorder %v427, %v483
  %vm491 = vcmp.eq.f32.partialorder %v432, %v483
  %vm492 = vcmp.eq.f32.partialorder %v437, %v483
  %vm493 = vcmp.eq.f32.partialorder %v442, %v483
  %vm494 = vcmp.eq.f32.partialorder %v447, %v483
  %vm495 = vcmp.eq.f32.partialorder %v452, %v483
  %vm496 = vcmp.eq.f32.partialorder %v457, %v483
  %vm497 = vcmp.eq.f32.partialorder %v462, %v483
  %vm498 = vcmp.eq.f32.partialorder %v467, %v483
  %vm499 = vcmp.eq.f32.partialorder %v472, %v483
  %vm500 = vcmp.eq.f32.partialorder %v477, %v483
  %vm501 = vmxor %vm485, 1
  %vm502 = vmxor %vm486, 1
  %vm503 = vmxor %vm487, 1
  %vm504 = vmxor %vm488, 1
  %vm505 = vmxor %vm489, 1
  %vm506 = vmxor %vm490, 1
  %vm507 = vmxor %vm491, 1
  %vm508 = vmxor %vm492, 1
  %vm509 = vmxor %vm493, 1
  %vm510 = vmxor %vm494, 1
  %vm511 = vmxor %vm495, 1
  %vm512 = vmxor %vm496, 1
  %vm513 = vmxor %vm497, 1
  %vm514 = vmxor %vm498, 1
  %vm515 = vmxor %vm499, 1
  %vm516 = vmxor %vm500, 1
  %vm517 = vmand %vm501, %vm334
  %vm518 = vmand %vm502, %vm334
  %vm519 = vmand %vm503, %vm334
  %vm520 = vmand %vm504, %vm334
  %vm521 = vmand %vm505, %vm334
  %vm522 = vmand %vm506, %vm334
  %vm523 = vmand %vm507, %vm334
  %vm524 = vmand %vm508, %vm334
  %vm525 = vmand %vm509, %vm334
  %vm526 = vmand %vm510, %vm334
  %vm527 = vmand %vm511, %vm334
  %vm528 = vmand %vm512, %vm334
  %vm529 = vmand %vm513, %vm334
  %vm530 = vmand %vm514, %vm334
  %vm531 = vmand %vm515, %vm334
  %vm532 = vmand %vm516, %vm334
  %v533 = vsub.f32 %v246, %v383
  %v534 = vsub.f32 %v247, %v384
  %v535 = vsub.f32 %v248, %v385
  %v536 = vsub.f32 %v249, %v386
  %v537 = vsub.f32 %v250, %v387
  %v538 = vsub.f32 %v251, %v388
  %v539 = vsub.f32 %v252, %v389
  %v540 = vsub.f32 %v253, %v390
  %v541 = vsub.f32 %v254, %v391
  %v542 = vsub.f32 %v255, %v392
  %v543 = vsub.f32 %v256, %v393
  %v544 = vsub.f32 %v257, %v394
  %v545 = vsub.f32 %v258, %v395
  %v546 = vsub.f32 %v259, %v396
  %v547 = vsub.f32 %v260, %v397
  %v548 = vsub.f32 %v261, %v398
  %v549 = vmul.f32 %v533, 1.442695
  %v550 = vpow.pop %v549
  %v551 = vmul.f32 %v534, 1.442695
  %v552 = vpow.pop %v551
  %v553 = vmul.f32 %v535, 1.442695
  %v554 = vpow.pop %v553
  %v555 = vmul.f32 %v536, 1.442695
  %v556 = vpow.pop %v555
  %v557 = vmul.f32 %v537, 1.442695
  %v558 = vpow.pop %v557
  %v559 = vmul.f32 %v538, 1.442695
  %v560 = vpow.pop %v559
  %v561 = vmul.f32 %v539, 1.442695
  %v562 = vpow.pop %v561
  %v563 = vmul.f32 %v540, 1.442695
  %v564 = vpow.pop %v563
  %v565 = vmul.f32 %v541, 1.442695
  %v566 = vpow.pop %v565
  %v567 = vmul.f32 %v542, 1.442695
  %v568 = vpow.pop %v567
  %v569 = vmul.f32 %v543, 1.442695
  %v570 = vpow.pop %v569
  %v571 = vmul.f32 %v544, 1.442695
  %v572 = vpow.pop %v571
  %v573 = vmul.f32 %v545, 1.442695
  %v574 = vpow.pop %v573
  %v575 = vmul.f32 %v546, 1.442695
  %v576 = vpow.pop %v575
  %v577 = vmul.f32 %v547, 1.442695
  %v578 = vpow.pop %v577
  %v579 = vmul.f32 %v548, 1.442695
  %v580 = vpow.pop %v579
  %v581 = vsel %vm517, %v550, 0.0
  %v582 = vsel %vm518, %v552, 0.0
  %v583 = vsel %vm519, %v554, 0.0
  %v584 = vsel %vm520, %v556, 0.0
  %v585 = vsel %vm521, %v558, 0.0
  %v586 = vsel %vm522, %v560, 0.0
  %v587 = vsel %vm523, %v562, 0.0
  %v588 = vsel %vm524, %v564, 0.0
  %v589 = vsel %vm525, %v566, 0.0
  %v590 = vsel %vm526, %v568, 0.0
  %v591 = vsel %vm527, %v570, 0.0
  %v592 = vsel %vm528, %v572, 0.0
  %v593 = vsel %vm529, %v574, 0.0
  %v594 = vsel %vm530, %v576, 0.0
  %v595 = vsel %vm531, %v578, 0.0
  %v596 = vsel %vm532, %v580, 0.0
  %597 = vadd.xlane.f32.xlu0 %v581
  %v598 = vpop.xlane.xlu0 %597
  %599 = vadd.xlane.f32.xlu0 %v582
  %v600 = vpop.xlane.xlu0 %599
  %601 = vadd.xlane.f32.xlu0 %v583
  %v602 = vpop.xlane.xlu0 %601
  %603 = vadd.xlane.f32.xlu0 %v584
  %v604 = vpop.xlane.xlu0 %603
  %605 = vadd.xlane.f32.xlu0 %v585
  %v606 = vpop.xlane.xlu0 %605
  %607 = vadd.xlane.f32.xlu0 %v586
  %v608 = vpop.xlane.xlu0 %607
  %609 = vadd.xlane.f32.xlu0 %v587
  %v610 = vpop.xlane.xlu0 %609
  %611 = vadd.xlane.f32.xlu0 %v588
  %v612 = vpop.xlane.xlu0 %611
  %613 = vadd.xlane.f32.xlu0 %v589
  %v614 = vpop.xlane.xlu0 %613
  %615 = vadd.xlane.f32.xlu0 %v590
  %v616 = vpop.xlane.xlu0 %615
  %617 = vadd.xlane.f32.xlu0 %v591
  %v618 = vpop.xlane.xlu0 %617
  %619 = vadd.xlane.f32.xlu0 %v592
  %v620 = vpop.xlane.xlu0 %619
  %621 = vadd.xlane.f32.xlu0 %v593
  %v622 = vpop.xlane.xlu0 %621
  %623 = vadd.xlane.f32.xlu0 %v594
  %v624 = vpop.xlane.xlu0 %623
  %625 = vadd.xlane.f32.xlu0 %v595
  %v626 = vpop.xlane.xlu0 %625
  %627 = vadd.xlane.f32.xlu0 %v596
  %v628 = vpop.xlane.xlu0 %627
  %v629 = vadd.f32 %v598, 0.0
  %v630 = vadd.f32 %v600, 0.0
  %v631 = vadd.f32 %v602, 0.0
  %v632 = vadd.f32 %v604, 0.0
  %v633 = vadd.f32 %v606, 0.0
  %v634 = vadd.f32 %v608, 0.0
  %v635 = vadd.f32 %v610, 0.0
  %v636 = vadd.f32 %v612, 0.0
  %v637 = vadd.f32 %v614, 0.0
  %v638 = vadd.f32 %v616, 0.0
  %v639 = vadd.f32 %v618, 0.0
  %v640 = vadd.f32 %v620, 0.0
  %v641 = vadd.f32 %v622, 0.0
  %v642 = vadd.f32 %v624, 0.0
  %v643 = vadd.f32 %v626, 0.0
  %v644 = vadd.f32 %v628, 0.0
  %vm645 = vcmp.ne.s32.totalorder %v314, %v331
  %vm646 = vcmp.ne.s32.totalorder %v315, %v331
  %vm647 = vcmp.ne.s32.totalorder %v316, %v331
  %vm648 = vcmp.ne.s32.totalorder %v317, %v331
  %vm649 = vcmp.ne.s32.totalorder %v318, %v331
  %vm650 = vcmp.ne.s32.totalorder %v319, %v331
  %vm651 = vcmp.ne.s32.totalorder %v320, %v331
  %vm652 = vcmp.ne.s32.totalorder %v321, %v331
  %vm653 = vcmp.ne.s32.totalorder %v322, %v331
  %vm654 = vcmp.ne.s32.totalorder %v323, %v331
  %vm655 = vcmp.ne.s32.totalorder %v324, %v331
  %vm656 = vcmp.ne.s32.totalorder %v325, %v331
  %vm657 = vcmp.ne.s32.totalorder %v326, %v331
  %vm658 = vcmp.ne.s32.totalorder %v327, %v331
  %vm659 = vcmp.ne.s32.totalorder %v328, %v331
  %vm660 = vcmp.ne.s32.totalorder %v329, %v331
  %vm661 = vmand %vm485, %vm645
  %vm662 = vmand %vm486, %vm646
  %vm663 = vmand %vm487, %vm647
  %vm664 = vmand %vm488, %vm648
  %vm665 = vmand %vm489, %vm649
  %vm666 = vmand %vm490, %vm650
  %vm667 = vmand %vm491, %vm651
  %vm668 = vmand %vm492, %vm652
  %vm669 = vmand %vm493, %vm653
  %vm670 = vmand %vm494, %vm654
  %vm671 = vmand %vm495, %vm655
  %vm672 = vmand %vm496, %vm656
  %vm673 = vmand %vm497, %vm657
  %vm674 = vmand %vm498, %vm658
  %vm675 = vmand %vm499, %vm659
  %vm676 = vmand %vm500, %vm660
  %v677 = vadd.f32 %v550, %v629
  %v678 = vadd.f32 %v552, %v630
  %v679 = vadd.f32 %v554, %v631
  %v680 = vadd.f32 %v556, %v632
  %v681 = vadd.f32 %v558, %v633
  %v682 = vadd.f32 %v560, %v634
  %v683 = vadd.f32 %v562, %v635
  %v684 = vadd.f32 %v564, %v636
  %v685 = vadd.f32 %v566, %v637
  %v686 = vadd.f32 %v568, %v638
  %v687 = vadd.f32 %v570, %v639
  %v688 = vadd.f32 %v572, %v640
  %v689 = vadd.f32 %v574, %v641
  %v690 = vadd.f32 %v576, %v642
  %v691 = vadd.f32 %v578, %v643
  %v692 = vadd.f32 %v580, %v644
  %v693 = vlog2.pop %v677
  %v694 = vmul.f32 %v693, 0.6931472
  %v695 = vlog2.pop %v678
  %v696 = vmul.f32 %v695, 0.6931472
  %v697 = vlog2.pop %v679
  %v698 = vmul.f32 %v697, 0.6931472
  %v699 = vlog2.pop %v680
  %v700 = vmul.f32 %v699, 0.6931472
  %v701 = vlog2.pop %v681
  %v702 = vmul.f32 %v701, 0.6931472
  %v703 = vlog2.pop %v682
  %v704 = vmul.f32 %v703, 0.6931472
  %v705 = vlog2.pop %v683
  %v706 = vmul.f32 %v705, 0.6931472
  %v707 = vlog2.pop %v684
  %v708 = vmul.f32 %v707, 0.6931472
  %v709 = vlog2.pop %v685
  %v710 = vmul.f32 %v709, 0.6931472
  %v711 = vlog2.pop %v686
  %v712 = vmul.f32 %v711, 0.6931472
  %v713 = vlog2.pop %v687
  %v714 = vmul.f32 %v713, 0.6931472
  %v715 = vlog2.pop %v688
  %v716 = vmul.f32 %v715, 0.6931472
  %v717 = vlog2.pop %v689
  %v718 = vmul.f32 %v717, 0.6931472
  %v719 = vlog2.pop %v690
  %v720 = vmul.f32 %v719, 0.6931472
  %v721 = vlog2.pop %v691
  %v722 = vmul.f32 %v721, 0.6931472
  %v723 = vlog2.pop %v692
  %v724 = vmul.f32 %v723, 0.6931472
  %v725 = vsub.f32 %v533, %v694
  %v726 = vsub.f32 %v534, %v696
  %v727 = vsub.f32 %v535, %v698
  %v728 = vsub.f32 %v536, %v700
  %v729 = vsub.f32 %v537, %v702
  %v730 = vsub.f32 %v538, %v704
  %v731 = vsub.f32 %v539, %v706
  %v732 = vsub.f32 %v540, %v708
  %v733 = vsub.f32 %v541, %v710
  %v734 = vsub.f32 %v542, %v712
  %v735 = vsub.f32 %v543, %v714
  %v736 = vsub.f32 %v544, %v716
  %v737 = vsub.f32 %v545, %v718
  %v738 = vsub.f32 %v546, %v720
  %v739 = vsub.f32 %v547, %v722
  %v740 = vsub.f32 %v548, %v724
  %v741 = vsel %vm661, %v725, 0.0
  %v742 = vsel %vm662, %v726, 0.0
  %v743 = vsel %vm663, %v727, 0.0
  %v744 = vsel %vm664, %v728, 0.0
  %v745 = vsel %vm665, %v729, 0.0
  %v746 = vsel %vm666, %v730, 0.0
  %v747 = vsel %vm667, %v731, 0.0
  %v748 = vsel %vm668, %v732, 0.0
  %v749 = vsel %vm669, %v733, 0.0
  %v750 = vsel %vm670, %v734, 0.0
  %v751 = vsel %vm671, %v735, 0.0
  %v752 = vsel %vm672, %v736, 0.0
  %v753 = vsel %vm673, %v737, 0.0
  %v754 = vsel %vm674, %v738, 0.0
  %v755 = vsel %vm675, %v739, 0.0
  %v756 = vsel %vm676, %v740, 0.0
  %757 = vadd.xlane.f32.xlu0 %v741
  %v758 = vpop.xlane.xlu0 %757
  %759 = vadd.xlane.f32.xlu0 %v742
  %v760 = vpop.xlane.xlu0 %759
  %761 = vadd.xlane.f32.xlu0 %v743
  %v762 = vpop.xlane.xlu0 %761
  %763 = vadd.xlane.f32.xlu0 %v744
  %v764 = vpop.xlane.xlu0 %763
  %765 = vadd.xlane.f32.xlu0 %v745
  %v766 = vpop.xlane.xlu0 %765
  %767 = vadd.xlane.f32.xlu0 %v746
  %v768 = vpop.xlane.xlu0 %767
  %769 = vadd.xlane.f32.xlu0 %v747
  %v770 = vpop.xlane.xlu0 %769
  %771 = vadd.xlane.f32.xlu0 %v748
  %v772 = vpop.xlane.xlu0 %771
  %773 = vadd.xlane.f32.xlu0 %v749
  %v774 = vpop.xlane.xlu0 %773
  %775 = vadd.xlane.f32.xlu0 %v750
  %v776 = vpop.xlane.xlu0 %775
  %777 = vadd.xlane.f32.xlu0 %v751
  %v778 = vpop.xlane.xlu0 %777
  %779 = vadd.xlane.f32.xlu0 %v752
  %v780 = vpop.xlane.xlu0 %779
  %781 = vadd.xlane.f32.xlu0 %v753
  %v782 = vpop.xlane.xlu0 %781
  %783 = vadd.xlane.f32.xlu0 %v754
  %v784 = vpop.xlane.xlu0 %783
  %785 = vadd.xlane.f32.xlu0 %v755
  %v786 = vpop.xlane.xlu0 %785
  %787 = vadd.xlane.f32.xlu0 %v756
  %v788 = vpop.xlane.xlu0 %787
  %v789 = vadd.f32 %v758, 0.0
  %v790 = vadd.f32 %v760, 0.0
  %v791 = vadd.f32 %v762, 0.0
  %v792 = vadd.f32 %v764, 0.0
  %v793 = vadd.f32 %v766, 0.0
  %v794 = vadd.f32 %v768, 0.0
  %v795 = vadd.f32 %v770, 0.0
  %v796 = vadd.f32 %v772, 0.0
  %v797 = vadd.f32 %v774, 0.0
  %v798 = vadd.f32 %v776, 0.0
  %v799 = vadd.f32 %v778, 0.0
  %v800 = vadd.f32 %v780, 0.0
  %v801 = vadd.f32 %v782, 0.0
  %v802 = vadd.f32 %v784, 0.0
  %v803 = vadd.f32 %v786, 0.0
  %v804 = vadd.f32 %v788, 0.0
  %v805 = vmul.f32 %v789, -1.4285715
  %v806 = vmul.f32 %v790, -1.4285715
  %v807 = vmul.f32 %v791, -1.4285715
  %v808 = vmul.f32 %v792, -1.4285715
  %v809 = vmul.f32 %v793, -1.4285715
  %v810 = vmul.f32 %v794, -1.4285715
  %v811 = vmul.f32 %v795, -1.4285715
  %v812 = vmul.f32 %v796, -1.4285715
  %v813 = vmul.f32 %v797, -1.4285715
  %v814 = vmul.f32 %v798, -1.4285715
  %v815 = vmul.f32 %v799, -1.4285715
  %v816 = vmul.f32 %v800, -1.4285715
  %v817 = vmul.f32 %v801, -1.4285715
  %v818 = vmul.f32 %v802, -1.4285715
  %v819 = vmul.f32 %v803, -1.4285715
  %v820 = vmul.f32 %v804, -1.4285715
  %v821 = vmul.f32 %v805, %v279
  %v822 = vmul.f32 %v806, %v280
  %v823 = vmul.f32 %v807, %v281
  %v824 = vmul.f32 %v808, %v282
  %v825 = vmul.f32 %v809, %v283
  %v826 = vmul.f32 %v810, %v284
  %v827 = vmul.f32 %v811, %v285
  %v828 = vmul.f32 %v812, %v286
  %v829 = vmul.f32 %v813, %v287
  %v830 = vmul.f32 %v814, %v288
  %v831 = vmul.f32 %v815, %v289
  %v832 = vmul.f32 %v816, %v290
  %v833 = vmul.f32 %v817, %v291
  %v834 = vmul.f32 %v818, %v292
  %v835 = vmul.f32 %v819, %v293
  %v836 = vmul.f32 %v820, %v294
  %vm837 = vcmask 7168
  %838 = vst.msk [vmem:[%s5] sm:$0xff] %vm837, %v821
  %839 = vst.msk [vmem:[%s5 + $0x8] sm:$0xff] %vm837, %v822
  %840 = vst.msk [vmem:[%s5 + $0x10] sm:$0xff] %vm837, %v823
  %841 = vst.msk [vmem:[%s5 + $0x18] sm:$0xff] %vm837, %v824
  %842 = vst.msk [vmem:[%s5 + $0x20] sm:$0xff] %vm837, %v825
  %843 = vst.msk [vmem:[%s5 + $0x28] sm:$0xff] %vm837, %v826
  %844 = vst.msk [vmem:[%s5 + $0x30] sm:$0xff] %vm837, %v827
  %845 = vst.msk [vmem:[%s5 + $0x38] sm:$0xff] %vm837, %v828
  %846 = vst.msk [vmem:[%s5 + $0x40] sm:$0xff] %vm837, %v829
  %847 = vst.msk [vmem:[%s5 + $0x48] sm:$0xff] %vm837, %v830
  %848 = vst.msk [vmem:[%s5 + $0x50] sm:$0xff] %vm837, %v831
  %849 = vst.msk [vmem:[%s5 + $0x58] sm:$0xff] %vm837, %v832
  %850 = vst.msk [vmem:[%s5 + $0x60] sm:$0xff] %vm837, %v833
  %851 = vst.msk [vmem:[%s5 + $0x68] sm:$0xff] %vm837, %v834
  %852 = vst.msk [vmem:[%s5 + $0x70] sm:$0xff] %vm837, %v835
  %853 = vst.msk [vmem:[%s5 + $0x78] sm:$0xff] %vm837, %v836
  // Predicated region
  $region22: #{tpu_custom_call.1} parent=0 // pred_check
    _
  $region23: #{tpu_custom_call.1} parent=0 // pred_check_branch
    %855 = sbr.rel (0) target = $region25
  $region24: #{tpu_custom_call.1} parent=0 // pred_region
    _
  $region25: #{tpu_custom_call.1} parent=0 // pred_fallthru
    _
  // Predicated region
  $region26: #{tpu_custom_call.1} parent=0 // pred_check
    _
  $region27: #{tpu_custom_call.1} parent=0 // pred_check_branch
    %857 = sbr.rel (0) target = $region29
  $region28: #{tpu_custom_call.1} parent=0 // pred_region
    _
  $region29: #{tpu_custom_call.1} parent=0 // pred_fallthru
    _

</llo_original>
